<compile_context>
chip_gen: v7x
topology: tpu7x:2x2x1
jax: 0.10.0
libtpu: 0.0.40
codegen_flags: <defaults>
</compile_context>

<pallas_src>
import functools
import math

import jax
import jax.numpy as jnp
from jax import lax
from jax.experimental import pallas as pl
from jax.experimental.pallas import tpu as pltpu


def _round_up(x, m):
    return ((x + m - 1) // m) * m


def _sage_kernel(a_ref, hk_ref, hi_ref, ws_ref, wa_ref, b_ref, g_ref, be_ref,
                 o_ref, acc_ref, *, f_in, f_out):
    k = pl.program_id(1)

    @pl.when(k == 0)
    def _init():
        acc_ref[...] = jnp.zeros_like(acc_ref)

    # ---- neighbor-sum accumulation over the K (source-node) axis (MXU) ----
    # adjacency is stored as bf16 0/1 -> exact after upcast; accumulate in f32.
    a = a_ref[...].astype(jnp.float32)                       # [TM, TK]
    acc_ref[...] += jnp.dot(a, hk_ref[...],
                            preferred_element_type=jnp.float32)  # [TM, F_in_p]

    @pl.when(k == pl.num_programs(1) - 1)
    def _epilogue():
        acc = acc_ref[...]                                   # [TM, F_in_p]
        h_self = hi_ref[...]                                 # [TM, F_in_p]

        # Column f_in of h was set to 1.0, so acc[:, f_in] is the in-degree
        # (computed by the same matmul; no cross-lane reduction needed).
        deg = acc[:, f_in:f_in + 1]                          # [TM, 1]
        inv = pl.reciprocal(jnp.maximum(deg, 1.0), approx=True)
        ah = jnp.where(deg > 0.0, acc * inv, h_self)         # mean / zero-deg fallback

        # linear on cat(h, ah): h @ W_self + ah @ W_agg + b  (padded lanes -> 0)
        z = (jnp.dot(h_self, ws_ref[...], preferred_element_type=jnp.float32)
             + jnp.dot(ah, wa_ref[...], preferred_element_type=jnp.float32)
             + b_ref[...])                                   # [TM, F_out_p]

        # LayerNorm over the real f_out lanes only (padded lanes of z are exactly 0,
        # so the plain sum already equals the sum over real lanes).
        mu = jnp.sum(z, axis=-1, keepdims=True) * (1.0 / f_out)
        lane = lax.broadcasted_iota(jnp.int32, z.shape, 1)
        zc = jnp.where(lane < f_out, z - mu, 0.0)
        var = jnp.sum(zc * zc, axis=-1, keepdims=True) * (1.0 / f_out)
        zn = zc * lax.rsqrt(var + 1e-5)
        y = zn * g_ref[...] + be_ref[...]

        # activation (ReLU); padded lanes come out as 0 and are sliced off outside.
        o_ref[...] = jnp.maximum(y, 0.0).astype(o_ref.dtype)


@functools.partial(jax.jit, static_argnames=("tm", "tk"))
def graphsage_forward(adj, h, w, b, gamma, beta, *, tm=512, tk=512):
    """adj: [N, N] (0/1), h: [N, F_in], w: [2*F_in, F_out], b/gamma/beta: [F_out]."""
    n, f_in = h.shape
    f_out = w.shape[1]

    f_in_p = _round_up(f_in + 1, 128)     # +1 reserves the in-degree "ones" column
    f_out_p = _round_up(f_out, 128)       # lane-dense output stores
    n_pad = _round_up(n, math.lcm(tm, tk))

    # adjacency: zero-pad, store as bf16 (lossless for 0/1, halves HBM traffic).
    adj_p = jnp.zeros((n_pad, n_pad), jnp.bfloat16)
    adj_p = adj_p.at[:n, :n].set(adj.astype(jnp.bfloat16))

    # features: zero-pad; column f_in = 1.0 so A @ h_p also yields the in-degree.
    h_p = jnp.zeros((n_pad, f_in_p), jnp.float32)
    h_p = h_p.at[:n, :f_in].set(h.astype(jnp.float32))
    h_p = h_p.at[:n, f_in].set(1.0)

    # split + zero-pad the linear weight so cat(h, ah) @ W == h@Ws + ah@Wa.
    w = w.astype(jnp.float32)
    ws_p = jnp.zeros((f_in_p, f_out_p), jnp.float32).at[:f_in, :f_out].set(w[:f_in])
    wa_p = jnp.zeros((f_in_p, f_out_p), jnp.float32).at[:f_in, :f_out].set(w[f_in:])
    b_p = jnp.zeros((1, f_out_p), jnp.float32).at[0, :f_out].set(b.astype(jnp.float32))
    g_p = jnp.ones((1, f_out_p), jnp.float32).at[0, :f_out].set(gamma.astype(jnp.float32))
    be_p = jnp.zeros((1, f_out_p), jnp.float32).at[0, :f_out].set(beta.astype(jnp.float32))

    grid = (n_pad // tm, n_pad // tk)
    kernel = functools.partial(_sage_kernel, f_in=f_in, f_out=f_out)

    cost = pl.CostEstimate(
        flops=2 * n_pad * n_pad * f_in_p + 4 * n_pad * f_in_p * f_out_p,
        transcendentals=2 * n_pad,
        bytes_accessed=(n_pad * n_pad * 2            # bf16 adjacency stream
                        + 2 * n_pad * f_in_p * 4     # neighbor + self feature streams
                        + n_pad * f_out_p * 4),      # output
    )

    out_p = pl.pallas_call(
        kernel,
        out_shape=jax.ShapeDtypeStruct((n_pad, f_out_p), jnp.float32),
        grid_spec=pltpu.PrefetchScalarGridSpec(
            num_scalar_prefetch=0,
            grid=grid,
            in_specs=[
                pl.BlockSpec((tm, tk), lambda i, k: (i, k)),           # A tile
                pl.BlockSpec((tk, f_in_p), lambda i, k: (k, 0)),       # neighbor feats
                pl.BlockSpec((tm, f_in_p), lambda i, k: (i, 0)),       # self feats
                pl.BlockSpec((f_in_p, f_out_p), lambda i, k: (0, 0)),  # W_self
                pl.BlockSpec((f_in_p, f_out_p), lambda i, k: (0, 0)),  # W_agg
                pl.BlockSpec((1, f_out_p), lambda i, k: (0, 0)),       # bias
                pl.BlockSpec((1, f_out_p), lambda i, k: (0, 0)),       # gamma
                pl.BlockSpec((1, f_out_p), lambda i, k: (0, 0)),       # beta
            ],
            out_specs=pl.BlockSpec((tm, f_out_p), lambda i, k: (i, 0)),
            scratch_shapes=[pltpu.VMEM((tm, f_in_p), jnp.float32)],
        ),
        compiler_params=pltpu.CompilerParams(
            dimension_semantics=("parallel", "arbitrary"),
            vmem_limit_bytes=32 * 1024 * 1024,
        ),
        cost_estimate=cost,
    )(adj_p, h_p, h_p, ws_p, wa_p, b_p, g_p, be_p)

    return out_p[:n, :f_out]


def _reference(adj, h, w, b, gamma, beta):
    deg = jnp.sum(adj, axis=1, keepdims=True)
    agg = adj @ h
    ah = jnp.where(deg > 0, agg / jnp.where(deg > 0, deg, 1.0), h)
    z = jnp.concatenate([h, ah], axis=1) @ w + b
    mu = jnp.mean(z, axis=-1, keepdims=True)
    var = jnp.mean((z - mu) ** 2, axis=-1, keepdims=True)
    zn = (z - mu) / jnp.sqrt(var + 1e-5)
    return jnp.maximum(zn * gamma + beta, 0.0)


if __name__ == "__main__":
    # Small graph; tile sizes chosen so the (row, K) grid and the accumulator /
    # epilogue path are actually exercised (n_pad=256 -> grid (4, 2)).
    N, F_IN, F_OUT = 200, 32, 32
    TM, TK = 64, 128

    key = jax.random.PRNGKey(0)
    k_adj, k_h, k_w, k_b = jax.random.split(key, 4)

    # Random directed graph (dst-major adjacency); force one zero-in-degree row
    # to exercise the fallback path.
    adj = (jax.random.uniform(k_adj, (N, N)) < 0.3).astype(jnp.float32)
    adj = adj.at[5, :].set(0.0)

    h = jax.random.normal(k_h, (N, F_IN), dtype=jnp.float32)

    # Deterministic parameter init (Linear(2*F_IN, F_OUT) + LayerNorm(F_OUT)).
    bound = 1.0 / jnp.sqrt(2.0 * F_IN)
    w = jax.random.uniform(k_w, (2 * F_IN, F_OUT), minval=-bound, maxval=bound,
                           dtype=jnp.float32)
    b = jax.random.uniform(k_b, (F_OUT,), minval=-bound, maxval=bound,
                           dtype=jnp.float32)
    gamma = jnp.ones((F_OUT,), jnp.float32)
    beta = jnp.zeros((F_OUT,), jnp.float32)

    out = graphsage_forward(adj, h, w, b, gamma, beta, tm=TM, tk=TK)
    jax.block_until_ready(out)

    ref = _reference(adj, h, w, b, gamma, beta)
    assert out.shape == (N, F_OUT)
    # Tolerance accounts for the EUP approximate reciprocal used for 1/deg.
    assert jnp.allclose(out, ref, atol=2e-3, rtol=2e-3)

    # TODO(synk): 'pool'/'lstm'/'attn' aggregators and training-mode dropout are
    # not implemented; only the 'mean' aggregator eval path is kernelized.
    print("KERNEL_OK")
</pallas_src>

<mosaic_0001>
module attributes {stable_mosaic.version = 11 : i64} {
  func.func @_sage_kernel(%arg0: i32, %arg1: i32, %arg2: memref<64x128xbf16, #tpu.memory_space<vmem>>, %arg3: memref<128x128xf32, #tpu.memory_space<vmem>>, %arg4: memref<64x128xf32, #tpu.memory_space<vmem>>, %arg5: memref<128x128xf32, #tpu.memory_space<vmem>>, %arg6: memref<128x128xf32, #tpu.memory_space<vmem>>, %arg7: memref<1x128xf32, #tpu.memory_space<vmem>>, %arg8: memref<1x128xf32, #tpu.memory_space<vmem>>, %arg9: memref<1x128xf32, #tpu.memory_space<vmem>>, %arg10: memref<64x128xf32, #tpu.memory_space<vmem>>, %arg11: memref<64x128xf32, #tpu.memory_space<vmem>>) attributes {dimension_semantics = [#tpu.dimension_semantics<parallel>, #tpu.dimension_semantics<arbitrary>], iteration_bounds = array<i64: 4, 2>, scalar_prefetch = 0 : i64, scratch_operands = 1 : i64, tpu.core_type = #tpu.core_type<tc>, window_params = [{transform_indices = @transform_0, window_bounds = array<i64: 64, 128>}, {transform_indices = @transform_1, window_bounds = array<i64: 128, 128>}, {transform_indices = @transform_2, window_bounds = array<i64: 64, 128>}, {pipeline_mode = #tpu.pipeline_mode<synchronous>, transform_indices = @transform_3, window_bounds = array<i64: 128, 128>}, {pipeline_mode = #tpu.pipeline_mode<synchronous>, transform_indices = @transform_4, window_bounds = array<i64: 128, 128>}, {pipeline_mode = #tpu.pipeline_mode<synchronous>, transform_indices = @transform_5, window_bounds = array<i64: 1, 128>}, {pipeline_mode = #tpu.pipeline_mode<synchronous>, transform_indices = @transform_6, window_bounds = array<i64: 1, 128>}, {pipeline_mode = #tpu.pipeline_mode<synchronous>, transform_indices = @transform_7, window_bounds = array<i64: 1, 128>}, {transform_indices = @transform_8, window_bounds = array<i64: 64, 128>}]} {
    %c0_i32 = arith.constant 0 : i32
    %0 = arith.cmpi eq, %arg1, %c0_i32 : i32
    %1 = arith.extui %0 : i1 to i32
    %c0_i32_0 = arith.constant 0 : i32
    %2 = arith.cmpi ne, %1, %c0_i32_0 : i32
    scf.if %2 {
      %cst_9 = arith.constant 0.000000e+00 : f32
      %13 = vector.broadcast %cst_9 : f32 to vector<64x128xf32>
      %c0_10 = arith.constant 0 : index
      %c0_11 = arith.constant 0 : index
      %14 = vector.load %arg11[%c0_10, %c0_11] : memref<64x128xf32, #tpu.memory_space<vmem>>, vector<64x128xf32>
      tpu.vector_store %arg11[%c0_10, %c0_11], %13 {strides = array<i32>} : memref<64x128xf32, #tpu.memory_space<vmem>>, vector<64x128xf32>,
    } else {
    }
    %c0 = arith.constant 0 : index
    %c0_1 = arith.constant 0 : index
    %3 = vector.load %arg2[%c0, %c0_1] : memref<64x128xbf16, #tpu.memory_space<vmem>>, vector<64x128xbf16>
    %4 = arith.extf %3 : vector<64x128xbf16> to vector<64x128xf32>
    %c0_2 = arith.constant 0 : index
    %c0_3 = arith.constant 0 : index
    %5 = vector.load %arg11[%c0_2, %c0_3] : memref<64x128xf32, #tpu.memory_space<vmem>>, vector<64x128xf32>
    %c0_4 = arith.constant 0 : index
    %c0_5 = arith.constant 0 : index
    %6 = vector.load %arg3[%c0_4, %c0_5] : memref<128x128xf32, #tpu.memory_space<vmem>>, vector<128x128xf32>
    %cst = arith.constant dense<0.000000e+00> : vector<64x128xf32>
    %7 = tpu.matmul %4, %6, %cst {dimension_numbers = #tpu.dot_dimension_numbers<[1], [0], [0], [1], [0, 0, 1, 1], [], []>} : vector<64x128xf32>, vector<128x128xf32>, vector<64x128xf32> -> vector<64x128xf32>
    %8 = arith.addf %5, %7 : vector<64x128xf32>
    %c0_6 = arith.constant 0 : index
    %c0_7 = arith.constant 0 : index
    %9 = vector.load %arg11[%c0_6, %c0_7] : memref<64x128xf32, #tpu.memory_space<vmem>>, vector<64x128xf32>
    tpu.vector_store %arg11[%c0_6, %c0_7], %8 {strides = array<i32>} : memref<64x128xf32, #tpu.memory_space<vmem>>, vector<64x128xf32>,
    %c1_i32 = arith.constant 1 : i32
    %10 = arith.cmpi eq, %arg1, %c1_i32 : i32
    %11 = arith.extui %10 : i1 to i32
    %c0_i32_8 = arith.constant 0 : i32
    %12 = arith.cmpi ne, %11, %c0_i32_8 : i32
    scf.if %12 {
      %c0_9 = arith.constant 0 : index
      %c0_10 = arith.constant 0 : index
      %13 = vector.load %arg11[%c0_9, %c0_10] : memref<64x128xf32, #tpu.memory_space<vmem>>, vector<64x128xf32>
      %c0_11 = arith.constant 0 : index
      %c0_12 = arith.constant 0 : index
      %14 = vector.load %arg4[%c0_11, %c0_12] : memref<64x128xf32, #tpu.memory_space<vmem>>, vector<64x128xf32>
      %15 = vector.extract_strided_slice %13 {offsets = [0, 32], sizes = [64, 1], strides = [1, 1]} : vector<64x128xf32> to vector<64x1xf32>
      %cst_13 = arith.constant 1.000000e+00 : f32
      %16 = vector.broadcast %cst_13 : f32 to vector<64x1xf32>
      %17 = arith.maximumf %15, %16 : vector<64x1xf32>
      %18 = tpu.reciprocal %17 {approx = true} : vector<64x1xf32> -> vector<64x1xf32>
      %cst_14 = arith.constant 0.000000e+00 : f32
      %19 = vector.broadcast %cst_14 : f32 to vector<64x1xf32>
      %20 = arith.cmpf ogt, %15, %19 : vector<64x1xf32>
      %21 = vector.broadcast %18 : vector<64x1xf32> to vector<64x128xf32>
      %22 = arith.mulf %13, %21 : vector<64x128xf32>
      %23 = vector.shape_cast %20 : vector<64x1xi1> to vector<64x1xi1>
      %24 = vector.broadcast %23 : vector<64x1xi1> to vector<64x128xi1>
      %25 = arith.select %24, %22, %14 : vector<64x128xi1>, vector<64x128xf32>
      %c0_15 = arith.constant 0 : index
      %c0_16 = arith.constant 0 : index
      %26 = vector.load %arg5[%c0_15, %c0_16] : memref<128x128xf32, #tpu.memory_space<vmem>>, vector<128x128xf32>
      %cst_17 = arith.constant dense<0.000000e+00> : vector<64x128xf32>
      %27 = tpu.matmul %14, %26, %cst_17 {dimension_numbers = #tpu.dot_dimension_numbers<[1], [0], [0], [1], [0, 0, 1, 1], [], []>} : vector<64x128xf32>, vector<128x128xf32>, vector<64x128xf32> -> vector<64x128xf32>
      %c0_18 = arith.constant 0 : index
      %c0_19 = arith.constant 0 : index
      %28 = vector.load %arg6[%c0_18, %c0_19] : memref<128x128xf32, #tpu.memory_space<vmem>>, vector<128x128xf32>
      %cst_20 = arith.constant dense<0.000000e+00> : vector<64x128xf32>
      %29 = tpu.matmul %25, %28, %cst_20 {dimension_numbers = #tpu.dot_dimension_numbers<[1], [0], [0], [1], [0, 0, 1, 1], [], []>} : vector<64x128xf32>, vector<128x128xf32>, vector<64x128xf32> -> vector<64x128xf32>
      %30 = arith.addf %27, %29 : vector<64x128xf32>
      %c0_21 = arith.constant 0 : index
      %c0_22 = arith.constant 0 : index
      %31 = vector.load %arg7[%c0_21, %c0_22] : memref<1x128xf32, #tpu.memory_space<vmem>>, vector<1x128xf32>
      %32 = vector.broadcast %31 : vector<1x128xf32> to vector<64x128xf32>
      %33 = arith.addf %30, %32 : vector<64x128xf32>
      %cst_23 = arith.constant dense<0.000000e+00> : vector<64xf32>
      %34 = vector.multi_reduction <add>, %33, %cst_23 [1] : vector<64x128xf32> to vector<64xf32>
      %35 = vector.shape_cast %34 : vector<64xf32> to vector<64x1xf32>
      %cst_24 = arith.constant 3.125000e-02 : f32
      %36 = vector.broadcast %cst_24 : f32 to vector<64x1xf32>
      %37 = arith.mulf %35, %36 : vector<64x1xf32>
      %38 = tpu.iota {dimensions = array<i32: 1>} : vector<64x128xi32>
      %c32_i32 = arith.constant 32 : i32
      %39 = vector.broadcast %c32_i32 : i32 to vector<64x128xi32>
      %40 = arith.cmpi slt, %38, %39 : vector<64x128xi32>
      %41 = vector.broadcast %37 : vector<64x1xf32> to vector<64x128xf32>
      %42 = arith.subf %33, %41 : vector<64x128xf32>
      %cst_25 = arith.constant 0.000000e+00 : f32
      %43 = vector.broadcast %cst_25 : f32 to vector<64x128xf32>
      %44 = arith.select %40, %42, %43 : vector<64x128xi1>, vector<64x128xf32>
      %45 = arith.mulf %44, %44 : vector<64x128xf32>
      %cst_26 = arith.constant dense<0.000000e+00> : vector<64xf32>
      %46 = vector.multi_reduction <add>, %45, %cst_26 [1] : vector<64x128xf32> to vector<64xf32>
      %47 = vector.shape_cast %46 : vector<64xf32> to vector<64x1xf32>
      %cst_27 = arith.constant 3.125000e-02 : f32
      %48 = vector.broadcast %cst_27 : f32 to vector<64x1xf32>
      %49 = arith.mulf %47, %48 : vector<64x1xf32>
      %cst_28 = arith.constant 9.99999974E-6 : f32
      %50 = vector.broadcast %cst_28 : f32 to vector<64x1xf32>
      %51 = arith.addf %49, %50 : vector<64x1xf32>
      %52 = math.rsqrt %51 : vector<64x1xf32>
      %53 = vector.broadcast %52 : vector<64x1xf32> to vector<64x128xf32>
      %54 = arith.mulf %44, %53 : vector<64x128xf32>
      %c0_29 = arith.constant 0 : index
      %c0_30 = arith.constant 0 : index
      %55 = vector.load %arg8[%c0_29, %c0_30] : memref<1x128xf32, #tpu.memory_space<vmem>>, vector<1x128xf32>
      %56 = vector.broadcast %55 : vector<1x128xf32> to vector<64x128xf32>
      %57 = arith.mulf %54, %56 : vector<64x128xf32>
      %c0_31 = arith.constant 0 : index
      %c0_32 = arith.constant 0 : index
      %58 = vector.load %arg9[%c0_31, %c0_32] : memref<1x128xf32, #tpu.memory_space<vmem>>, vector<1x128xf32>
      %59 = vector.broadcast %58 : vector<1x128xf32> to vector<64x128xf32>
      %60 = arith.addf %57, %59 : vector<64x128xf32>
      %cst_33 = arith.constant 0.000000e+00 : f32
      %61 = vector.broadcast %cst_33 : f32 to vector<64x128xf32>
      %62 = arith.maximumf %60, %61 : vector<64x128xf32>
      %c0_34 = arith.constant 0 : index
      %c0_35 = arith.constant 0 : index
      %63 = vector.load %arg10[%c0_34, %c0_35] : memref<64x128xf32, #tpu.memory_space<vmem>>, vector<64x128xf32>
      tpu.vector_store %arg10[%c0_34, %c0_35], %62 {strides = array<i32>} : memref<64x128xf32, #tpu.memory_space<vmem>>, vector<64x128xf32>,
    } else {
    }
    return
  }
  func.func @transform_0(%arg0: i32, %arg1: i32) -> (i32, i32) {
    %c0_i32 = arith.constant 0 : i32
    return %arg0, %arg1 : i32, i32
  }
  func.func @transform_1(%arg0: i32, %arg1: i32) -> (i32, i32) {
    %c0_i32 = arith.constant 0 : i32
    %c0_i32_0 = arith.constant 0 : i32
    return %arg1, %c0_i32 : i32, i32
  }
  func.func @transform_2(%arg0: i32, %arg1: i32) -> (i32, i32) {
    %c0_i32 = arith.constant 0 : i32
    %c0_i32_0 = arith.constant 0 : i32
    return %arg0, %c0_i32 : i32, i32
  }
  func.func @transform_3(%arg0: i32, %arg1: i32) -> (i32, i32) {
    %c0_i32 = arith.constant 0 : i32
    %c0_i32_0 = arith.constant 0 : i32
    %c0_i32_1 = arith.constant 0 : i32
    return %c0_i32, %c0_i32_0 : i32, i32
  }
  func.func @transform_4(%arg0: i32, %arg1: i32) -> (i32, i32) {
    %c0_i32 = arith.constant 0 : i32
    %c0_i32_0 = arith.constant 0 : i32
    %c0_i32_1 = arith.constant 0 : i32
    return %c0_i32, %c0_i32_0 : i32, i32
  }
  func.func @transform_5(%arg0: i32, %arg1: i32) -> (i32, i32) {
    %c0_i32 = arith.constant 0 : i32
    %c0_i32_0 = arith.constant 0 : i32
    %c0_i32_1 = arith.constant 0 : i32
    return %c0_i32, %c0_i32_0 : i32, i32
  }
  func.func @transform_6(%arg0: i32, %arg1: i32) -> (i32, i32) {
    %c0_i32 = arith.constant 0 : i32
    %c0_i32_0 = arith.constant 0 : i32
    %c0_i32_1 = arith.constant 0 : i32
    return %c0_i32, %c0_i32_0 : i32, i32
  }
  func.func @transform_7(%arg0: i32, %arg1: i32) -> (i32, i32) {
    %c0_i32 = arith.constant 0 : i32
    %c0_i32_0 = arith.constant 0 : i32
    %c0_i32_1 = arith.constant 0 : i32
    return %c0_i32, %c0_i32_0 : i32, i32
  }
  func.func @transform_8(%arg0: i32, %arg1: i32) -> (i32, i32) {
    %c0_i32 = arith.constant 0 : i32
    %c0_i32_0 = arith.constant 0 : i32
    return %arg0, %c0_i32 : i32, i32
  }
}

</mosaic_0001>

<llo_original>
// kernel: graphsage_forward.1
$region0: #{graphsage_forward.1}
  #allocation0 [shape = 'u32[]', space=smem, size = 0x4, offset = 0x4, fixed_abs, tag = 'smem constant byte address 0x4 - core index']
  #allocation1 [shape = 'u32[144,128]{1,0:T(1,128)}', space=vmem, size = 0x12000, scoped, tag = 'internal scratch']
  #allocation2 [shape = 'f32[64,128]{1,0:T(8,128)}', space=vmem, size = 0x8000, scoped, tag = 'scratch operand']
  %s0 = inlined_call_operand.vmem [shape: bf16[256,256], index: 0, kind: input, shape index: {}]
  %s1 = inlined_call_operand.vmem [shape: f32[256,128], index: 1, kind: input, shape index: {}, may-alias: {1,2}]
  %s2 = inlined_call_operand.vmem [shape: f32[256,128], index: 2, kind: input, shape index: {}, may-alias: {1,2}]
  %s3 = inlined_call_operand.vmem [shape: f32[128,128], index: 3, kind: input, shape index: {}]
  %s4 = inlined_call_operand.vmem [shape: f32[128,128], index: 4, kind: input, shape index: {}]
  %s5 = inlined_call_operand.vmem [shape: f32[1,128], index: 5, kind: input, shape index: {}]
  %s6 = inlined_call_operand.vmem [shape: f32[1,128], index: 6, kind: input, shape index: {}]
  %s7 = inlined_call_operand.vmem [shape: f32[1,128], index: 7, kind: input, shape index: {}]
  %s8 = inlined_call_operand.vmem [shape: f32[256,128], index: 8, kind: output, shape index: {}]
  %s9 = sld [smem:[#allocation0]]
  $region114: #{graphsage_forward.1} parent=0
    _
  %s11 = ssub.s32 1, %s9
  %s12 = scalar_select 0, %s11, %s9
  $region1: #{graphsage_forward.1} parent=0
    #allocation3 [shape = 'u8[32768]{0}', space=vmem, size = 0x8000, scoped, tag = 'input window, operand 0']
    loop: start=0, step=1, limit=10
    $region2: #{graphsage_forward.1} parent=1 // loop_pre_header
      _
    $region3: #{graphsage_forward.1} parent=1 // loop_header
      %s14 = sphi 0, %s18
      %p15 = scmp.ge.s32.totalorder %s14, 10
      %s21 = sphi 0, %s33
      %s22 = sphi 0, %s29
      %s23 = sphi 0, %s21
      %s24 = sphi 0, %s22
      %s25 = sphi 0, %s23
      %s26 = sphi 0, %s24
      %s38 = sphi 0, %s40
      %s41 = sphi 0, %s38
      %s42 = sphi 0, %s41
      %s58 = sphi 0, %s42
      %s64 = sphi 0, %s66
      %s67 = sphi 0, %s64
      %s68 = sphi 0, %s67
      %s84 = sphi 0, %s68
      %s90 = sphi 0, %s92
      %s93 = sphi 0, %s90
      %s94 = sphi 0, %s93
      %s110 = sphi 0, %s94
      %s114 = sphi 0, %s114
      %s116 = sphi 0, %s114
      %s117 = sphi 0, %s116
      %s131 = sphi 0, %s117
      %s135 = sphi 0, %s135
      %s137 = sphi 0, %s135
      %s138 = sphi 0, %s137
      %s152 = sphi 0, %s138
      %s156 = sphi 0, %s156
      %s158 = sphi 0, %s156
      %s159 = sphi 0, %s158
      %s173 = sphi 0, %s159
      %s177 = sphi 0, %s177
      %s179 = sphi 0, %s177
      %s180 = sphi 0, %s179
      %s194 = sphi 0, %s180
      %s198 = sphi 0, %s198
      %s200 = sphi 0, %s198
      %s201 = sphi 0, %s200
      %s215 = sphi 0, %s201
      %s221 = sphi 0, %s223
      %s224 = sphi 0, %s221
      %s225 = sphi 0, %s224
      %s241 = sphi 0, %s225
    $region4: #{graphsage_forward.1} parent=1 // loop_header_branch
      %17 = sbr.rel (%p15) target = $region8
    $region5: #{graphsage_forward.1} parent=1 // loop_body
      %s19 = ssub.s32 %s14, 1
      %s20 = ssub.s32 %s14, 2
      %s27 = sadd.s32 1, %s22
      %p28 = scmp.ge.s32.totalorder %s27, 2
      %s29 = scalar_select %p28, 0, %s27
      %s30 = sadd.s32 1, %s21
      %s31 = scalar_select %p28, %s30, %s21
      %p32 = scmp.ge.s32.totalorder %s31, 4
      %s33 = scalar_select %p32, 0, %s31
      %s34 = ssub.s32 %s21, %s33
      %s35 = ssub.s32 %s22, %s29
      %s36 = sor.u32 %s34, %s35
      %p37 = scmp.eq.s32.totalorder %s36, 0
      %s39 = sadd.s32 %s38, 1
      %s40 = scalar_select %p37, %s38, %s39
      %p43 = pneg %p37
      %p44 = scmp.eq.s32.totalorder %s14, 7
      %p45 = por %p43, %p44
      %p46 = scmp.ne.s32.totalorder %s38, %s41
      %p47 = scmp.eq.s32.totalorder %s14, 0
      %p48 = por %p46, %p47
      %p49 = scmp.ne.s32.totalorder %s38, %s41
      %p50 = scmp.eq.s32.totalorder %s19, 7
      %p51 = por %p49, %p50
      %p52 = scmp.ne.s32.totalorder %s41, %s42
      %p53 = scmp.eq.s32.totalorder %s19, 0
      %p54 = por %p52, %p53
      %p55 = scmp.ne.s32.totalorder %s41, %s42
      %p56 = scmp.eq.s32.totalorder %s20, 7
      %p57 = por %p55, %p56
      %p59 = scmp.ne.s32.totalorder %s42, %s58
      %p60 = scmp.eq.s32.totalorder %s20, 0
      %p61 = por %p59, %p60
      %s62 = ssub.s32 %s22, %s29
      %p63 = scmp.eq.s32.totalorder %s62, 0
      %s65 = sadd.s32 %s64, 1
      %s66 = scalar_select %p63, %s64, %s65
      %p69 = pneg %p63
      %p70 = scmp.eq.s32.totalorder %s14, 7
      %p71 = por %p69, %p70
      %p72 = scmp.ne.s32.totalorder %s64, %s67
      %p73 = scmp.eq.s32.totalorder %s14, 0
      %p74 = por %p72, %p73
      %p75 = scmp.ne.s32.totalorder %s64, %s67
      %p76 = scmp.eq.s32.totalorder %s19, 7
      %p77 = por %p75, %p76
      %p78 = scmp.ne.s32.totalorder %s67, %s68
      %p79 = scmp.eq.s32.totalorder %s19, 0
      %p80 = por %p78, %p79
      %p81 = scmp.ne.s32.totalorder %s67, %s68
      %p82 = scmp.eq.s32.totalorder %s20, 7
      %p83 = por %p81, %p82
      %p85 = scmp.ne.s32.totalorder %s68, %s84
      %p86 = scmp.eq.s32.totalorder %s20, 0
      %p87 = por %p85, %p86
      %s88 = ssub.s32 %s21, %s33
      %p89 = scmp.eq.s32.totalorder %s88, 0
      %s91 = sadd.s32 %s90, 1
      %s92 = scalar_select %p89, %s90, %s91
      %p95 = pneg %p89
      %p96 = scmp.eq.s32.totalorder %s14, 7
      %p97 = por %p95, %p96
      %p98 = scmp.ne.s32.totalorder %s90, %s93
      %p99 = scmp.eq.s32.totalorder %s14, 0
      %p100 = por %p98, %p99
      %p101 = scmp.ne.s32.totalorder %s90, %s93
      %p102 = scmp.eq.s32.totalorder %s19, 7
      %p103 = por %p101, %p102
      %p104 = scmp.ne.s32.totalorder %s93, %s94
      %p105 = scmp.eq.s32.totalorder %s19, 0
      %p106 = por %p104, %p105
      %p107 = scmp.ne.s32.totalorder %s93, %s94
      %p108 = scmp.eq.s32.totalorder %s20, 7
      %p109 = por %p107, %p108
      %p111 = scmp.ne.s32.totalorder %s94, %s110
      %p112 = scmp.eq.s32.totalorder %s20, 0
      %p113 = por %p111, %p112
      %s115 = sadd.s32 %s114, 1
      %p118 = scmp.eq.s32.totalorder %s14, 7
      %p119 = scmp.ne.s32.totalorder %s114, %s116
      %p120 = scmp.eq.s32.totalorder %s14, 0
      %p121 = por %p119, %p120
      %p122 = scmp.ne.s32.totalorder %s114, %s116
      %p123 = scmp.eq.s32.totalorder %s19, 7
      %p124 = por %p122, %p123
      %p125 = scmp.ne.s32.totalorder %s116, %s117
      %p126 = scmp.eq.s32.totalorder %s19, 0
      %p127 = por %p125, %p126
      %p128 = scmp.ne.s32.totalorder %s116, %s117
      %p129 = scmp.eq.s32.totalorder %s20, 7
      %p130 = por %p128, %p129
      %p132 = scmp.ne.s32.totalorder %s117, %s131
      %p133 = scmp.eq.s32.totalorder %s20, 0
      %p134 = por %p132, %p133
      %s136 = sadd.s32 %s135, 1
      %p139 = scmp.eq.s32.totalorder %s14, 7
      %p140 = scmp.ne.s32.totalorder %s135, %s137
      %p141 = scmp.eq.s32.totalorder %s14, 0
      %p142 = por %p140, %p141
      %p143 = scmp.ne.s32.totalorder %s135, %s137
      %p144 = scmp.eq.s32.totalorder %s19, 7
      %p145 = por %p143, %p144
      %p146 = scmp.ne.s32.totalorder %s137, %s138
      %p147 = scmp.eq.s32.totalorder %s19, 0
      %p148 = por %p146, %p147
      %p149 = scmp.ne.s32.totalorder %s137, %s138
      %p150 = scmp.eq.s32.totalorder %s20, 7
      %p151 = por %p149, %p150
      %p153 = scmp.ne.s32.totalorder %s138, %s152
      %p154 = scmp.eq.s32.totalorder %s20, 0
      %p155 = por %p153, %p154
      %s157 = sadd.s32 %s156, 1
      %p160 = scmp.eq.s32.totalorder %s14, 7
      %p161 = scmp.ne.s32.totalorder %s156, %s158
      %p162 = scmp.eq.s32.totalorder %s14, 0
      %p163 = por %p161, %p162
      %p164 = scmp.ne.s32.totalorder %s156, %s158
      %p165 = scmp.eq.s32.totalorder %s19, 7
      %p166 = por %p164, %p165
      %p167 = scmp.ne.s32.totalorder %s158, %s159
      %p168 = scmp.eq.s32.totalorder %s19, 0
      %p169 = por %p167, %p168
      %p170 = scmp.ne.s32.totalorder %s158, %s159
      %p171 = scmp.eq.s32.totalorder %s20, 7
      %p172 = por %p170, %p171
      %p174 = scmp.ne.s32.totalorder %s159, %s173
      %p175 = scmp.eq.s32.totalorder %s20, 0
      %p176 = por %p174, %p175
      %s178 = sadd.s32 %s177, 1
      %p181 = scmp.eq.s32.totalorder %s14, 7
      %p182 = scmp.ne.s32.totalorder %s177, %s179
      %p183 = scmp.eq.s32.totalorder %s14, 0
      %p184 = por %p182, %p183
      %p185 = scmp.ne.s32.totalorder %s177, %s179
      %p186 = scmp.eq.s32.totalorder %s19, 7
      %p187 = por %p185, %p186
      %p188 = scmp.ne.s32.totalorder %s179, %s180
      %p189 = scmp.eq.s32.totalorder %s19, 0
      %p190 = por %p188, %p189
      %p191 = scmp.ne.s32.totalorder %s179, %s180
      %p192 = scmp.eq.s32.totalorder %s20, 7
      %p193 = por %p191, %p192
      %p195 = scmp.ne.s32.totalorder %s180, %s194
      %p196 = scmp.eq.s32.totalorder %s20, 0
      %p197 = por %p195, %p196
      %s199 = sadd.s32 %s198, 1
      %p202 = scmp.eq.s32.totalorder %s14, 7
      %p203 = scmp.ne.s32.totalorder %s198, %s200
      %p204 = scmp.eq.s32.totalorder %s14, 0
      %p205 = por %p203, %p204
      %p206 = scmp.ne.s32.totalorder %s198, %s200
      %p207 = scmp.eq.s32.totalorder %s19, 7
      %p208 = por %p206, %p207
      %p209 = scmp.ne.s32.totalorder %s200, %s201
      %p210 = scmp.eq.s32.totalorder %s19, 0
      %p211 = por %p209, %p210
      %p212 = scmp.ne.s32.totalorder %s200, %s201
      %p213 = scmp.eq.s32.totalorder %s20, 7
      %p214 = por %p212, %p213
      %p216 = scmp.ne.s32.totalorder %s201, %s215
      %p217 = scmp.eq.s32.totalorder %s20, 0
      %p218 = por %p216, %p217
      %s219 = ssub.s32 %s21, %s33
      %p220 = scmp.eq.s32.totalorder %s219, 0
      %s222 = sadd.s32 %s221, 1
      %s223 = scalar_select %p220, %s221, %s222
      %p226 = pneg %p220
      %p227 = scmp.eq.s32.totalorder %s14, 7
      %p228 = por %p226, %p227
      %p229 = scmp.ne.s32.totalorder %s221, %s224
      %p230 = scmp.eq.s32.totalorder %s14, 0
      %p231 = por %p229, %p230
      %p232 = scmp.ne.s32.totalorder %s221, %s224
      %p233 = scmp.eq.s32.totalorder %s19, 7
      %p234 = por %p232, %p233
      %p235 = scmp.ne.s32.totalorder %s224, %s225
      %p236 = scmp.eq.s32.totalorder %s19, 0
      %p237 = por %p235, %p236
      %p238 = scmp.ne.s32.totalorder %s224, %s225
      %p239 = scmp.eq.s32.totalorder %s20, 7
      %p240 = por %p238, %p239
      %p242 = scmp.ne.s32.totalorder %s225, %s241
      %p243 = scmp.eq.s32.totalorder %s20, 0
      %p244 = por %p242, %p243
      %p245 = scmp.le.s32.totalorder 1, %s14
      %p246 = scmp.lt.s32.totalorder %s14, 9
      %p247 = pnand %p245, %p246
      %p248 = pneg %p247
      // Predicated region
      $region9: #{graphsage_forward.1} parent=5 // pred_check
        _
      $region10: #{graphsage_forward.1} parent=5 // pred_check_branch
        %250 = sbr.rel (%p247) target = $region12
      $region11: #{graphsage_forward.1} parent=5 // pred_region
        %s251 = ssub.s32 %s14, 1
        // Predicated region
        $region13: #{graphsage_forward.1} parent=11 // pred_check
          %p252 = pneg %p127
        $region14: #{graphsage_forward.1} parent=11 // pred_check_branch
          %254 = sbr.rel (%p252) target = $region16
        $region15: #{graphsage_forward.1} parent=11 // pred_region
          _
        $region16: #{graphsage_forward.1} parent=11 // pred_fallthru
          _
        // Predicated region
        $region17: #{graphsage_forward.1} parent=11 // pred_check
          %p255 = pneg %p148
        $region18: #{graphsage_forward.1} parent=11 // pred_check_branch
          %257 = sbr.rel (%p255) target = $region20
        $region19: #{graphsage_forward.1} parent=11 // pred_region
          _
        $region20: #{graphsage_forward.1} parent=11 // pred_fallthru
          _
        // Predicated region
        $region21: #{graphsage_forward.1} parent=11 // pred_check
          %p258 = pneg %p169
        $region22: #{graphsage_forward.1} parent=11 // pred_check_branch
          %260 = sbr.rel (%p258) target = $region24
        $region23: #{graphsage_forward.1} parent=11 // pred_region
          _
        $region24: #{graphsage_forward.1} parent=11 // pred_fallthru
          _
        // Predicated region
        $region25: #{graphsage_forward.1} parent=11 // pred_check
          %p261 = pneg %p190
        $region26: #{graphsage_forward.1} parent=11 // pred_check_branch
          %263 = sbr.rel (%p261) target = $region28
        $region27: #{graphsage_forward.1} parent=11 // pred_region
          _
        $region28: #{graphsage_forward.1} parent=11 // pred_fallthru
          _
        // Predicated region
        $region29: #{graphsage_forward.1} parent=11 // pred_check
          %p264 = pneg %p211
        $region30: #{graphsage_forward.1} parent=11 // pred_check_branch
          %266 = sbr.rel (%p264) target = $region32
        $region31: #{graphsage_forward.1} parent=11 // pred_region
          _
        $region32: #{graphsage_forward.1} parent=11 // pred_fallthru
          _
      $region12: #{graphsage_forward.1} parent=5 // pred_fallthru
        _
      %p267 = scmp.lt.s32.totalorder %s14, 8
      // Predicated region
      $region33: #{graphsage_forward.1} parent=5 // pred_check
        %p268 = pneg %p267
      $region34: #{graphsage_forward.1} parent=5 // pred_check_branch
        %270 = sbr.rel (%p268) target = $region36
      $region35: #{graphsage_forward.1} parent=5 // pred_region
        // Predicated region
        $region37: #{graphsage_forward.1} parent=35 // pred_check
          %p271 = pneg %p48
        $region38: #{graphsage_forward.1} parent=35 // pred_check_branch
          %273 = sbr.rel (%p271) target = $region40
        $region39: #{graphsage_forward.1} parent=35 // pred_region
          %s274 = sand.u32 %s38, 1
          %s275 = sand.u32 %s38, 1
          %s276 = smul.addr %s275, 32
          %s277 = scalar_lea.vmem [#allocation3], %s276
          %s278 = smul.u32 8, %s21
          %s279 = smul.addr %s278, 2
          %s280 = sadd.s32 %s22, %s279
          %s281 = smul.addr %s280, 4
          %s282 = scalar_lea.vmem %s0, %s281
          // Predicated region
          $region41: #{graphsage_forward.1} parent=39 // pred_check
            _
          $region42: #{graphsage_forward.1} parent=39 // pred_check_branch
            %284 = sbr.rel (0) target = $region44
          $region43: #{graphsage_forward.1} parent=39 // pred_region
            // Predicated region
            $region45: #{graphsage_forward.1} parent=43 // pred_check
              _
            $region46: #{graphsage_forward.1} parent=43 // pred_check_branch
              %286 = sbr.rel target = $region48
            $region47: #{graphsage_forward.1} parent=43 // pred_region
              // Predicated region
              $region60: #{graphsage_forward.1} parent=47 // pred_check
                _
              $region61: #{graphsage_forward.1} parent=47 // pred_check_branch
                %315 = sbr.rel (0) target = $region63
              $region62: #{graphsage_forward.1} parent=47 // pred_region
                loop: start=0, step=1, limit=1
                $region64: #{graphsage_forward.1} parent=62 // loop_pre_header
                  _
                $region65: #{graphsage_forward.1} parent=62 // loop_header
                  %s317 = sphi 0, %s321
                  %p318 = scmp.ge.s32.totalorder %s317, 1
                  %s322 = sphi %s282, %s282
                  %s323 = sphi %s277, %s277
                $region66: #{graphsage_forward.1} parent=62 // loop_header_branch
                  %320 = sbr.rel (%p318) target = $region70
                $region67: #{graphsage_forward.1} parent=62 // loop_body
                  _
                $region68: #{graphsage_forward.1} parent=62 // loop_footer
                  %s321 = sadd.s32 1, %s317
                $region69: #{graphsage_forward.1} parent=62 // loop_footer_branch
                  %316 = sbr.rel target = $region65
                $region70: #{graphsage_forward.1} parent=62 // loop_exit
                  _
                loop: start=0, step=1, limit=1
                $region71: #{graphsage_forward.1} parent=62 // loop_pre_header
                  _
                $region72: #{graphsage_forward.1} parent=62 // loop_header
                  %s326 = sphi 0, %s330
                  %p327 = scmp.ge.s32.totalorder %s326, 1
                  %s331 = sphi %s282, %s282
                  %s332 = sphi %s277, %s277
                $region73: #{graphsage_forward.1} parent=62 // loop_header_branch
                  %329 = sbr.rel (%p327) target = $region77
                $region74: #{graphsage_forward.1} parent=62 // loop_body
                  %v333 = vld [vmem:[%s331] sm:$0xf]
                  %334 = vst [vmem:[%s332] sm:$0xf] %v333
                  %v335 = vld [vmem:[%s331 + $0x8] sm:$0xf]
                  %336 = vst [vmem:[%s332 + $0x4] sm:$0xf] %v335
                  %v337 = vld [vmem:[%s331 + $0x10] sm:$0xf]
                  %338 = vst [vmem:[%s332 + $0x8] sm:$0xf] %v337
                  %v339 = vld [vmem:[%s331 + $0x18] sm:$0xf]
                  %340 = vst [vmem:[%s332 + $0xc] sm:$0xf] %v339
                  %v341 = vld [vmem:[%s331 + $0x20] sm:$0xf]
                  %342 = vst [vmem:[%s332 + $0x10] sm:$0xf] %v341
                  %v343 = vld [vmem:[%s331 + $0x28] sm:$0xf]
                  %344 = vst [vmem:[%s332 + $0x14] sm:$0xf] %v343
                  %v345 = vld [vmem:[%s331 + $0x30] sm:$0xf]
                  %346 = vst [vmem:[%s332 + $0x18] sm:$0xf] %v345
                  %v347 = vld [vmem:[%s331 + $0x38] sm:$0xf]
                  %348 = vst [vmem:[%s332 + $0x1c] sm:$0xf] %v347
                $region75: #{graphsage_forward.1} parent=62 // loop_footer
                  %s330 = sadd.s32 1, %s326
                $region76: #{graphsage_forward.1} parent=62 // loop_footer_branch
                  %325 = sbr.rel target = $region72
                $region77: #{graphsage_forward.1} parent=62 // loop_exit
                  _
              $region63: #{graphsage_forward.1} parent=47 // pred_fallthru
                _
            $region48: #{graphsage_forward.1} parent=43 // pred_fallthru
              _
            // Predicated region
            $region49: #{graphsage_forward.1} parent=43 // pred_check
              _
            $region50: #{graphsage_forward.1} parent=43 // pred_check_branch
              %288 = sbr.rel (0) target = $region52
            $region51: #{graphsage_forward.1} parent=43 // pred_region
              loop: start=0, step=1, limit=1
              $region53: #{graphsage_forward.1} parent=51 // loop_pre_header
                _
              $region54: #{graphsage_forward.1} parent=51 // loop_header
                %s291 = sphi 0, %s295
                %p292 = scmp.ge.s32.totalorder %s291, 1
                %s296 = sphi %s282, %s282
                %s297 = sphi %s277, %s277
              $region55: #{graphsage_forward.1} parent=51 // loop_header_branch
                %294 = sbr.rel (%p292) target = $region59
              $region56: #{graphsage_forward.1} parent=51 // loop_body
                %v298 = vld [vmem:[%s296] sm:$0xf]
                %299 = vst [vmem:[%s297] sm:$0xf] %v298
                %v300 = vld [vmem:[%s296 + $0x8] sm:$0xf]
                %301 = vst [vmem:[%s297 + $0x4] sm:$0xf] %v300
                %v302 = vld [vmem:[%s296 + $0x10] sm:$0xf]
                %303 = vst [vmem:[%s297 + $0x8] sm:$0xf] %v302
                %v304 = vld [vmem:[%s296 + $0x18] sm:$0xf]
                %305 = vst [vmem:[%s297 + $0xc] sm:$0xf] %v304
                %v306 = vld [vmem:[%s296 + $0x20] sm:$0xf]
                %307 = vst [vmem:[%s297 + $0x10] sm:$0xf] %v306
                %v308 = vld [vmem:[%s296 + $0x28] sm:$0xf]
                %309 = vst [vmem:[%s297 + $0x14] sm:$0xf] %v308
                %v310 = vld [vmem:[%s296 + $0x30] sm:$0xf]
                %311 = vst [vmem:[%s297 + $0x18] sm:$0xf] %v310
                %v312 = vld [vmem:[%s296 + $0x38] sm:$0xf]
                %313 = vst [vmem:[%s297 + $0x1c] sm:$0xf] %v312
              $region57: #{graphsage_forward.1} parent=51 // loop_footer
                %s295 = sadd.s32 1, %s291
              $region58: #{graphsage_forward.1} parent=51 // loop_footer_branch
                %290 = sbr.rel target = $region54
              $region59: #{graphsage_forward.1} parent=51 // loop_exit
                _
            $region52: #{graphsage_forward.1} parent=43 // pred_fallthru
              _
          $region44: #{graphsage_forward.1} parent=39 // pred_fallthru
            _
          %349 = vnop
        $region40: #{graphsage_forward.1} parent=35 // pred_fallthru
          _
        // Predicated region
        $region78: #{graphsage_forward.1} parent=35 // pred_check
          %p350 = pneg %p74
        $region79: #{graphsage_forward.1} parent=35 // pred_check_branch
          %352 = sbr.rel (%p350) target = $region81
        $region80: #{graphsage_forward.1} parent=35 // pred_region
          %s353 = smul.u32 16, %s22
          %p354 = scmp.lt.s32.totalorder %s353, 31
          %s355 = scalar_select %p354, %s353, 31
          %s356 = smul.addr %s355, 8
          %s357 = scalar_lea.vmem %s1, %s356
          %s358 = smul.u32 16, %s22
        $region81: #{graphsage_forward.1} parent=35 // pred_fallthru
          _
        // Predicated region
        $region82: #{graphsage_forward.1} parent=35 // pred_check
          %p359 = pneg %p100
        $region83: #{graphsage_forward.1} parent=35 // pred_check_branch
          %361 = sbr.rel (%p359) target = $region85
        $region84: #{graphsage_forward.1} parent=35 // pred_region
          %s362 = smul.u32 8, %s21
          %p363 = scmp.lt.s32.totalorder %s362, 31
          %s364 = scalar_select %p363, %s362, 31
          %s365 = smul.addr %s364, 8
          %s366 = scalar_lea.vmem %s2, %s365
          %s367 = smul.u32 8, %s21
        $region85: #{graphsage_forward.1} parent=35 // pred_fallthru
          _
      $region36: #{graphsage_forward.1} parent=5 // pred_fallthru
        _
      %p368 = scmp.le.s32.totalorder 1, %s14
      %p369 = scmp.lt.s32.totalorder %s14, 9
      %p370 = pnand %p368, %p369
      %p371 = pneg %p370
      // Predicated region
      $region86: #{graphsage_forward.1} parent=5 // pred_check
        _
      $region87: #{graphsage_forward.1} parent=5 // pred_check_branch
        %373 = sbr.rel (%p370) target = $region89
      $region88: #{graphsage_forward.1} parent=5 // pred_region
        %s374 = ssub.s32 %s14, 1
        %s375 = sand.u32 %s41, 1
        %s376 = sand.u32 %s41, 1
        %s377 = smul.addr %s376, 32
        %s378 = scalar_lea.vmem [#allocation3], %s377
        // Predicated region
        $region90: #{graphsage_forward.1} parent=88 // pred_check
          %p379 = pneg %p54
        $region91: #{graphsage_forward.1} parent=88 // pred_check_branch
          %381 = sbr.rel (%p379) target = $region93
        $region92: #{graphsage_forward.1} parent=88 // pred_region
          _
        $region93: #{graphsage_forward.1} parent=88 // pred_fallthru
          _
        %s382 = sand.u32 %s41, 1
        %s383 = sand.u32 %s41, 1
        %s384 = smul.addr %s383, 32
        %s385 = scalar_lea.vmem [#allocation3], %s384
        %p386 = pneg %p54
        %p387 = pneg %p51
        %s388 = smul.u32 16, %s24
        %p389 = scmp.lt.s32.totalorder %s388, 31
        %s390 = scalar_select %p389, %s388, 31
        %s391 = smul.addr %s390, 8
        %s392 = scalar_lea.vmem %s1, %s391
        %p393 = pneg %p80
        %p394 = pneg %p77
        %s395 = smul.u32 8, %s23
        %p396 = scmp.lt.s32.totalorder %s395, 31
        %s397 = scalar_select %p396, %s395, 31
        %s398 = smul.addr %s397, 8
        %s399 = scalar_lea.vmem %s2, %s398
        %p400 = pneg %p106
        %p401 = pneg %p103
        %p402 = pneg %p127
        %p403 = pneg %p124
        %p404 = pneg %p148
        %p405 = pneg %p145
        %p406 = pneg %p169
        %p407 = pneg %p166
        %p408 = pneg %p190
        %p409 = pneg %p187
        %p410 = pneg %p211
        %p411 = pneg %p208
        %p412 = pneg %p237
        %p413 = pneg %p234
        %s414 = smul.u32 8, %s23
        %p415 = scmp.lt.s32.totalorder %s414, 31
        %s416 = scalar_select %p415, %s414, 31
        %s417 = smul.addr %s416, 8
        %s418 = scalar_lea.vmem %s8, %s417
        %s419 = smul.u32 8, %s23
        %s420 = smul.u32 16, %s24
        %p421 = scmp.lt.s32.totalorder %s420, 31
        %s422 = scalar_select %p421, %s420, 31
        %s423 = smul.addr %s422, 8
        %s424 = scalar_lea.vmem %s1, %s423
        %s425 = smul.u32 16, %s24
        %s426 = smul.u32 8, %s23
        %p427 = scmp.lt.s32.totalorder %s426, 31
        %s428 = scalar_select %p427, %s426, 31
        %s429 = smul.addr %s428, 8
        %s430 = scalar_lea.vmem %s2, %s429
        %s431 = smul.u32 8, %s23
        %s432 = smul.u32 8, %s23
        %p433 = scmp.lt.s32.totalorder %s432, 31
        %s434 = scalar_select %p433, %s432, 31
        %s435 = smul.addr %s434, 8
        %s436 = scalar_lea.vmem %s8, %s435
        %s437 = smul.u32 8, %s23
        %p438 = scmp.eq.s32.totalorder %s24, 0
        // Predicated region
        $region94: #{graphsage_forward.1} parent=88 // pred_check
          %p439 = pneg %p438
        $region95: #{graphsage_forward.1} parent=88 // pred_check_branch
          %441 = sbr.rel (%p439) target = $region97
        $region96: #{graphsage_forward.1} parent=88 // pred_region
          %442 = vst [vmem:[#allocation2] sm:$0xff] 0.0
          %443 = vst [vmem:[#allocation2 + $0x8] sm:$0xff] 0.0
          %444 = vst [vmem:[#allocation2 + $0x10] sm:$0xff] 0.0
          %445 = vst [vmem:[#allocation2 + $0x18] sm:$0xff] 0.0
          %446 = vst [vmem:[#allocation2 + $0x20] sm:$0xff] 0.0
          %447 = vst [vmem:[#allocation2 + $0x28] sm:$0xff] 0.0
          %448 = vst [vmem:[#allocation2 + $0x30] sm:$0xff] 0.0
          %449 = vst [vmem:[#allocation2 + $0x38] sm:$0xff] 0.0
        $region97: #{graphsage_forward.1} parent=88 // pred_fallthru
          _
        %v450 = vld [vmem:[%s378] sm:$0xf]
        %v451 = vld [vmem:[%s378 + $0x4] sm:$0xf]
        %v452 = vld [vmem:[%s378 + $0x8] sm:$0xf]
        %v453 = vld [vmem:[%s378 + $0xc] sm:$0xf]
        %v454 = vld [vmem:[%s378 + $0x10] sm:$0xf]
        %v455 = vld [vmem:[%s378 + $0x14] sm:$0xf]
        %v456 = vld [vmem:[%s378 + $0x18] sm:$0xf]
        %v457 = vld [vmem:[%s378 + $0x1c] sm:$0xf]
        %v458 = vunpack.c.l.bf16 %v450
        %v459 = vunpack.c.l.bf16 %v451
        %v460 = vunpack.c.l.bf16 %v452
        %v461 = vunpack.c.l.bf16 %v453
        %v462 = vunpack.c.l.bf16 %v454
        %v463 = vunpack.c.l.bf16 %v455
        %v464 = vunpack.c.l.bf16 %v456
        %v465 = vunpack.c.l.bf16 %v457
        %v466 = vld [vmem:[#allocation2] sm:$0xff]
        %v467 = vld [vmem:[#allocation2 + $0x8] sm:$0xff]
        %v468 = vld [vmem:[#allocation2 + $0x10] sm:$0xff]
        %v469 = vld [vmem:[#allocation2 + $0x18] sm:$0xff]
        %v470 = vld [vmem:[#allocation2 + $0x20] sm:$0xff]
        %v471 = vld [vmem:[#allocation2 + $0x28] sm:$0xff]
        %v472 = vld [vmem:[#allocation2 + $0x30] sm:$0xff]
        %v473 = vld [vmem:[#allocation2 + $0x38] sm:$0xff]
        %v474 = vld [vmem:[%s424] sm:$0xff]
        %v475 = vld [vmem:[%s424 + $0x8] sm:$0xff]
        %v476 = vld [vmem:[%s424 + $0x10] sm:$0xff]
        %v477 = vld [vmem:[%s424 + $0x18] sm:$0xff]
        %v478 = vld [vmem:[%s424 + $0x20] sm:$0xff]
        %v479 = vld [vmem:[%s424 + $0x28] sm:$0xff]
        %v480 = vld [vmem:[%s424 + $0x30] sm:$0xff]
        %v481 = vld [vmem:[%s424 + $0x38] sm:$0xff]
        %v482 = vld [vmem:[%s424 + $0x40] sm:$0xff]
        %v483 = vld [vmem:[%s424 + $0x48] sm:$0xff]
        %v484 = vld [vmem:[%s424 + $0x50] sm:$0xff]
        %v485 = vld [vmem:[%s424 + $0x58] sm:$0xff]
        %v486 = vld [vmem:[%s424 + $0x60] sm:$0xff]
        %v487 = vld [vmem:[%s424 + $0x68] sm:$0xff]
        %v488 = vld [vmem:[%s424 + $0x70] sm:$0xff]
        %v489 = vld [vmem:[%s424 + $0x78] sm:$0xff]
        %490 = vmatprep.subr.mxu0 0.0
        %491 = vmatpush1.msra.mxu0 %v474
        %492 = vmatprep.subr.mxu0 0.0
        %493 = vmatpush1.msra.mxu0 %v475
        %494 = vmatprep.subr.mxu0 0.0
        %495 = vmatpush1.msra.mxu0 %v476
        %496 = vmatprep.subr.mxu0 0.0
        %497 = vmatpush1.msra.mxu0 %v477
        %498 = vmatprep.subr.mxu0 0.0
        %499 = vmatpush1.msra.mxu0 %v478
        %500 = vmatprep.subr.mxu0 0.0
        %501 = vmatpush1.msra.mxu0 %v479
        %502 = vmatprep.subr.mxu0 0.0
        %503 = vmatpush1.msra.mxu0 %v480
        %504 = vmatprep.subr.mxu0 0.0
        %505 = vmatpush1.msra.mxu0 %v481
        %506 = vmatprep.subr.mxu0 0.0
        %507 = vmatpush1.msra.mxu0 %v482
        %508 = vmatprep.subr.mxu0 0.0
        %509 = vmatpush1.msra.mxu0 %v483
        %510 = vmatprep.subr.mxu0 0.0
        %511 = vmatpush1.msra.mxu0 %v484
        %512 = vmatprep.subr.mxu0 0.0
        %513 = vmatpush1.msra.mxu0 %v485
        %514 = vmatprep.subr.mxu0 0.0
        %515 = vmatpush1.msra.mxu0 %v486
        %516 = vmatprep.subr.mxu0 0.0
        %517 = vmatpush1.msra.mxu0 %v487
        %518 = vmatprep.subr.mxu0 0.0
        %519 = vmatpush1.msra.mxu0 %v488
        %520 = vmatprep.subr.mxu0 0.0
        %521 = vmatpush1.msra.mxu0 %v489
        %522 = vmatprep.subr.mxu0 0.0
        %523 = vmatpush1.msra.mxu0 0.0
        %524 = vmatprep.subr.mxu0 0.0
        %525 = vmatpush1.msra.mxu0 0.0
        %526 = vmatprep.subr.mxu0 0.0
        %527 = vmatpush1.msra.mxu0 0.0
        %528 = vmatprep.subr.mxu0 0.0
        %529 = vmatpush1.msra.mxu0 0.0
        %530 = vmatprep.subr.mxu0 0.0
        %531 = vmatpush1.msra.mxu0 0.0
        %532 = vmatprep.subr.mxu0 0.0
        %533 = vmatpush1.msra.mxu0 0.0
        %534 = vmatprep.subr.mxu0 0.0
        %535 = vmatpush1.msra.mxu0 0.0
        %536 = vmatprep.subr.mxu0 0.0
        %537 = vmatpush1.msra.mxu0 0.0
        %538 = vmatprep.subr.mxu0 0.0
        %539 = vmatpush1.msra.mxu0 0.0
        %540 = vmatprep.subr.mxu0 0.0
        %541 = vmatpush1.msra.mxu0 0.0
        %542 = vmatprep.subr.mxu0 0.0
        %543 = vmatpush1.msra.mxu0 0.0
        %544 = vmatprep.subr.mxu0 0.0
        %545 = vmatpush1.msra.mxu0 0.0
        %546 = vmatprep.subr.mxu0 0.0
        %547 = vmatpush1.msra.mxu0 0.0
        %548 = vmatprep.subr.mxu0 0.0
        %549 = vmatpush1.msra.mxu0 0.0
        %550 = vmatprep.subr.mxu0 0.0
        %551 = vmatpush1.msra.mxu0 0.0
        %552 = vmatprep.subr.mxu0 0.0
        %553 = vmatpush1.msra.mxu0 0.0
        %554 = vmatprep.mubr.f32.mxu0 0.0
        %555 = vmatmul.mubr.f32.gmra.mrb[0].mxu0 %v458
        %v556 = vpop.f32.mrb[0].mxu0
        %v557 = vadd.f32 0.0, %v556
        %v558 = vpop.f32.mrb[0].mxu0
        %559 = vmatprep.mubr.f32.mxu0 0.0
        %560 = vmatmul.mubr.f32.gmra.mrb[0].mxu0 %v459
        %v561 = vpop.f32.mrb[0].mxu0
        %v562 = vadd.f32 0.0, %v561
        %v563 = vpop.f32.mrb[0].mxu0
        %564 = vmatprep.mubr.f32.mxu0 0.0
        %565 = vmatmul.mubr.f32.gmra.mrb[0].mxu0 %v460
        %v566 = vpop.f32.mrb[0].mxu0
        %v567 = vadd.f32 0.0, %v566
        %v568 = vpop.f32.mrb[0].mxu0
        %569 = vmatprep.mubr.f32.mxu0 0.0
        %570 = vmatmul.mubr.f32.gmra.mrb[0].mxu0 %v461
        %v571 = vpop.f32.mrb[0].mxu0
        %v572 = vadd.f32 0.0, %v571
        %v573 = vpop.f32.mrb[0].mxu0
        %574 = vmatprep.mubr.f32.mxu0 0.0
        %575 = vmatmul.mubr.f32.gmra.mrb[0].mxu0 %v462
        %v576 = vpop.f32.mrb[0].mxu0
        %v577 = vadd.f32 0.0, %v576
        %v578 = vpop.f32.mrb[0].mxu0
        %579 = vmatprep.mubr.f32.mxu0 0.0
        %580 = vmatmul.mubr.f32.gmra.mrb[0].mxu0 %v463
        %v581 = vpop.f32.mrb[0].mxu0
        %v582 = vadd.f32 0.0, %v581
        %v583 = vpop.f32.mrb[0].mxu0
        %584 = vmatprep.mubr.f32.mxu0 0.0
        %585 = vmatmul.mubr.f32.gmra.mrb[0].mxu0 %v464
        %v586 = vpop.f32.mrb[0].mxu0
        %v587 = vadd.f32 0.0, %v586
        %v588 = vpop.f32.mrb[0].mxu0
        %589 = vmatprep.mubr.f32.mxu0 0.0
        %590 = vmatmul.mubr.f32.gmra.mrb[0].mxu0 %v465
        %v591 = vpop.f32.mrb[0].mxu0
        %v592 = vadd.f32 0.0, %v591
        %v593 = vpop.f32.mrb[0].mxu0
        %594 = vdwg.mxu0
        %v595 = vadd.f32 %v466, %v557
        %v596 = vadd.f32 %v467, %v562
        %v597 = vadd.f32 %v468, %v567
        %v598 = vadd.f32 %v469, %v572
        %v599 = vadd.f32 %v470, %v577
        %v600 = vadd.f32 %v471, %v582
        %v601 = vadd.f32 %v472, %v587
        %v602 = vadd.f32 %v473, %v592
        %603 = vst [vmem:[#allocation2] sm:$0xff] %v595
        %604 = vst [vmem:[#allocation2 + $0x8] sm:$0xff] %v596
        %605 = vst [vmem:[#allocation2 + $0x10] sm:$0xff] %v597
        %606 = vst [vmem:[#allocation2 + $0x18] sm:$0xff] %v598
        %607 = vst [vmem:[#allocation2 + $0x20] sm:$0xff] %v599
        %608 = vst [vmem:[#allocation2 + $0x28] sm:$0xff] %v600
        %609 = vst [vmem:[#allocation2 + $0x30] sm:$0xff] %v601
        %610 = vst [vmem:[#allocation2 + $0x38] sm:$0xff] %v602
        %p611 = scmp.eq.s32.totalorder %s24, 1
        // Predicated region
        $region98: #{graphsage_forward.1} parent=88 // pred_check
          %p612 = pneg %p611
        $region99: #{graphsage_forward.1} parent=88 // pred_check_branch
          %614 = sbr.rel (%p612) target = $region101
        $region100: #{graphsage_forward.1} parent=88 // pred_region
          %v615 = vld [vmem:[#allocation2] sm:$0xff]
          %v616 = vld [vmem:[#allocation2 + $0x8] sm:$0xff]
          %v617 = vld [vmem:[#allocation2 + $0x10] sm:$0xff]
          %v618 = vld [vmem:[#allocation2 + $0x18] sm:$0xff]
          %v619 = vld [vmem:[#allocation2 + $0x20] sm:$0xff]
          %v620 = vld [vmem:[#allocation2 + $0x28] sm:$0xff]
          %v621 = vld [vmem:[#allocation2 + $0x30] sm:$0xff]
          %v622 = vld [vmem:[#allocation2 + $0x38] sm:$0xff]
          %v623 = vld [vmem:[%s430] sm:$0xff]
          %v624 = vld [vmem:[%s430 + $0x8] sm:$0xff]
          %v625 = vld [vmem:[%s430 + $0x10] sm:$0xff]
          %v626 = vld [vmem:[%s430 + $0x18] sm:$0xff]
          %v627 = vld [vmem:[%s430 + $0x20] sm:$0xff]
          %v628 = vld [vmem:[%s430 + $0x28] sm:$0xff]
          %v629 = vld [vmem:[%s430 + $0x30] sm:$0xff]
          %v630 = vld [vmem:[%s430 + $0x38] sm:$0xff]
          %v631 = vmax.f32 %v615, 1.0
          %v632 = vmax.f32 %v616, 1.0
          %v633 = vmax.f32 %v617, 1.0
          %v634 = vmax.f32 %v618, 1.0
          %v635 = vmax.f32 %v619, 1.0
          %v636 = vmax.f32 %v620, 1.0
          %v637 = vmax.f32 %v621, 1.0
          %v638 = vmax.f32 %v622, 1.0
          %v639 = vrcp.pop %v631
          %v640 = vrcp.pop %v632
          %v641 = vrcp.pop %v633
          %v642 = vrcp.pop %v634
          %v643 = vrcp.pop %v635
          %v644 = vrcp.pop %v636
          %v645 = vrcp.pop %v637
          %v646 = vrcp.pop %v638
          %vm647 = vcmp.gt.f32.partialorder %v615, 0.0
          %vm648 = vcmp.gt.f32.partialorder %v616, 0.0
          %vm649 = vcmp.gt.f32.partialorder %v617, 0.0
          %vm650 = vcmp.gt.f32.partialorder %v618, 0.0
          %vm651 = vcmp.gt.f32.partialorder %v619, 0.0
          %vm652 = vcmp.gt.f32.partialorder %v620, 0.0
          %vm653 = vcmp.gt.f32.partialorder %v621, 0.0
          %vm654 = vcmp.gt.f32.partialorder %v622, 0.0
          %656 = vset.pattern.permute.xlu0 32
          %657 = vperm.xlu0 %656, %v639
          %v658 = vpop.permute.xlu0 %657
          %661 = vset.pattern.permute.xlu0 32
          %662 = vperm.xlu0 %661, %v640
          %v663 = vpop.permute.xlu0 %662
          %666 = vset.pattern.permute.xlu0 32
          %667 = vperm.xlu0 %666, %v641
          %v668 = vpop.permute.xlu0 %667
          %671 = vset.pattern.permute.xlu0 32
          %672 = vperm.xlu0 %671, %v642
          %v673 = vpop.permute.xlu0 %672
          %676 = vset.pattern.permute.xlu0 32
          %677 = vperm.xlu0 %676, %v643
          %v678 = vpop.permute.xlu0 %677
          %681 = vset.pattern.permute.xlu0 32
          %682 = vperm.xlu0 %681, %v644
          %v683 = vpop.permute.xlu0 %682
          %686 = vset.pattern.permute.xlu0 32
          %687 = vperm.xlu0 %686, %v645
          %v688 = vpop.permute.xlu0 %687
          %691 = vset.pattern.permute.xlu0 32
          %692 = vperm.xlu0 %691, %v646
          %v693 = vpop.permute.xlu0 %692
          %v695 = vmul.f32 %v615, %v658
          %v696 = vmul.f32 %v616, %v663
          %v697 = vmul.f32 %v617, %v668
          %v698 = vmul.f32 %v618, %v673
          %v699 = vmul.f32 %v619, %v678
          %v700 = vmul.f32 %v620, %v683
          %v701 = vmul.f32 %v621, %v688
          %v702 = vmul.f32 %v622, %v693
          %v703 = vsel %vm647, 1, 0
          %v704 = vsel %vm648, 1, 0
          %v705 = vsel %vm649, 1, 0
          %v706 = vsel %vm650, 1, 0
          %v707 = vsel %vm651, 1, 0
          %v708 = vsel %vm652, 1, 0
          %v709 = vsel %vm653, 1, 0
          %v710 = vsel %vm654, 1, 0
          %711 = vset.pattern.permute.xlu0 32
          %712 = vperm.xlu0 %711, %v703
          %v713 = vpop.permute.xlu0 %712
          %714 = vset.pattern.permute.xlu0 32
          %715 = vperm.xlu0 %714, %v704
          %v716 = vpop.permute.xlu0 %715
          %717 = vset.pattern.permute.xlu0 32
          %718 = vperm.xlu0 %717, %v705
          %v719 = vpop.permute.xlu0 %718
          %720 = vset.pattern.permute.xlu0 32
          %721 = vperm.xlu0 %720, %v706
          %v722 = vpop.permute.xlu0 %721
          %723 = vset.pattern.permute.xlu0 32
          %724 = vperm.xlu0 %723, %v707
          %v725 = vpop.permute.xlu0 %724
          %726 = vset.pattern.permute.xlu0 32
          %727 = vperm.xlu0 %726, %v708
          %v728 = vpop.permute.xlu0 %727
          %729 = vset.pattern.permute.xlu0 32
          %730 = vperm.xlu0 %729, %v709
          %v731 = vpop.permute.xlu0 %730
          %732 = vset.pattern.permute.xlu0 32
          %733 = vperm.xlu0 %732, %v710
          %v734 = vpop.permute.xlu0 %733
          %vm735 = vcmp.eq.s32.totalorder %v713, 1
          %vm736 = vcmp.eq.s32.totalorder %v716, 1
          %vm737 = vcmp.eq.s32.totalorder %v719, 1
          %vm738 = vcmp.eq.s32.totalorder %v722, 1
          %vm739 = vcmp.eq.s32.totalorder %v725, 1
          %vm740 = vcmp.eq.s32.totalorder %v728, 1
          %vm741 = vcmp.eq.s32.totalorder %v731, 1
          %vm742 = vcmp.eq.s32.totalorder %v734, 1
          %v743 = vsel %vm735, %v695, %v623
          %v744 = vsel %vm736, %v696, %v624
          %v745 = vsel %vm737, %v697, %v625
          %v746 = vsel %vm738, %v698, %v626
          %v747 = vsel %vm739, %v699, %v627
          %v748 = vsel %vm740, %v700, %v628
          %v749 = vsel %vm741, %v701, %v629
          %v750 = vsel %vm742, %v702, %v630
          %v751 = vld [vmem:[%s3] sm:$0xff]
          %v752 = vld [vmem:[%s3 + $0x8] sm:$0xff]
          %v753 = vld [vmem:[%s3 + $0x10] sm:$0xff]
          %v754 = vld [vmem:[%s3 + $0x18] sm:$0xff]
          %v755 = vld [vmem:[%s3 + $0x20] sm:$0xff]
          %v756 = vld [vmem:[%s3 + $0x28] sm:$0xff]
          %v757 = vld [vmem:[%s3 + $0x30] sm:$0xff]
          %v758 = vld [vmem:[%s3 + $0x38] sm:$0xff]
          %v759 = vld [vmem:[%s3 + $0x40] sm:$0xff]
          %v760 = vld [vmem:[%s3 + $0x48] sm:$0xff]
          %v761 = vld [vmem:[%s3 + $0x50] sm:$0xff]
          %v762 = vld [vmem:[%s3 + $0x58] sm:$0xff]
          %v763 = vld [vmem:[%s3 + $0x60] sm:$0xff]
          %v764 = vld [vmem:[%s3 + $0x68] sm:$0xff]
          %v765 = vld [vmem:[%s3 + $0x70] sm:$0xff]
          %v766 = vld [vmem:[%s3 + $0x78] sm:$0xff]
          %v767 = vld [vmem:[%s4] sm:$0xff]
          %v768 = vld [vmem:[%s4 + $0x8] sm:$0xff]
          %v769 = vld [vmem:[%s4 + $0x10] sm:$0xff]
          %v770 = vld [vmem:[%s4 + $0x18] sm:$0xff]
          %v771 = vld [vmem:[%s4 + $0x20] sm:$0xff]
          %v772 = vld [vmem:[%s4 + $0x28] sm:$0xff]
          %v773 = vld [vmem:[%s4 + $0x30] sm:$0xff]
          %v774 = vld [vmem:[%s4 + $0x38] sm:$0xff]
          %v775 = vld [vmem:[%s4 + $0x40] sm:$0xff]
          %v776 = vld [vmem:[%s4 + $0x48] sm:$0xff]
          %v777 = vld [vmem:[%s4 + $0x50] sm:$0xff]
          %v778 = vld [vmem:[%s4 + $0x58] sm:$0xff]
          %v779 = vld [vmem:[%s4 + $0x60] sm:$0xff]
          %v780 = vld [vmem:[%s4 + $0x68] sm:$0xff]
          %v781 = vld [vmem:[%s4 + $0x70] sm:$0xff]
          %v782 = vld [vmem:[%s4 + $0x78] sm:$0xff]
          %783 = vmatprep.subr.mxu0 0.0
          %784 = vmatpush1.msra.mxu0 %v767
          %785 = vmatprep.subr.mxu0 0.0
          %786 = vmatpush1.msra.mxu0 %v768
          %787 = vmatprep.subr.mxu0 0.0
          %788 = vmatpush1.msra.mxu0 %v769
          %789 = vmatprep.subr.mxu0 0.0
          %790 = vmatpush1.msra.mxu0 %v770
          %791 = vmatprep.subr.mxu0 0.0
          %792 = vmatpush1.msra.mxu0 %v771
          %793 = vmatprep.subr.mxu0 0.0
          %794 = vmatpush1.msra.mxu0 %v772
          %795 = vmatprep.subr.mxu0 0.0
          %796 = vmatpush1.msra.mxu0 %v773
          %797 = vmatprep.subr.mxu0 0.0
          %798 = vmatpush1.msra.mxu0 %v774
          %799 = vmatprep.subr.mxu0 0.0
          %800 = vmatpush1.msra.mxu0 %v775
          %801 = vmatprep.subr.mxu0 0.0
          %802 = vmatpush1.msra.mxu0 %v776
          %803 = vmatprep.subr.mxu0 0.0
          %804 = vmatpush1.msra.mxu0 %v777
          %805 = vmatprep.subr.mxu0 0.0
          %806 = vmatpush1.msra.mxu0 %v778
          %807 = vmatprep.subr.mxu0 0.0
          %808 = vmatpush1.msra.mxu0 %v779
          %809 = vmatprep.subr.mxu0 0.0
          %810 = vmatpush1.msra.mxu0 %v780
          %811 = vmatprep.subr.mxu0 0.0
          %812 = vmatpush1.msra.mxu0 %v781
          %813 = vmatprep.subr.mxu0 0.0
          %814 = vmatpush1.msra.mxu0 %v782
          %815 = vmatprep.subr.mxu0 0.0
          %816 = vmatpush1.msra.mxu0 0.0
          %817 = vmatprep.subr.mxu0 0.0
          %818 = vmatpush1.msra.mxu0 0.0
          %819 = vmatprep.subr.mxu0 0.0
          %820 = vmatpush1.msra.mxu0 0.0
          %821 = vmatprep.subr.mxu0 0.0
          %822 = vmatpush1.msra.mxu0 0.0
          %823 = vmatprep.subr.mxu0 0.0
          %824 = vmatpush1.msra.mxu0 0.0
          %825 = vmatprep.subr.mxu0 0.0
          %826 = vmatpush1.msra.mxu0 0.0
          %827 = vmatprep.subr.mxu0 0.0
          %828 = vmatpush1.msra.mxu0 0.0
          %829 = vmatprep.subr.mxu0 0.0
          %830 = vmatpush1.msra.mxu0 0.0
          %831 = vmatprep.subr.mxu0 0.0
          %832 = vmatpush1.msra.mxu0 0.0
          %833 = vmatprep.subr.mxu0 0.0
          %834 = vmatpush1.msra.mxu0 0.0
          %835 = vmatprep.subr.mxu0 0.0
          %836 = vmatpush1.msra.mxu0 0.0
          %837 = vmatprep.subr.mxu0 0.0
          %838 = vmatpush1.msra.mxu0 0.0
          %839 = vmatprep.subr.mxu0 0.0
          %840 = vmatpush1.msra.mxu0 0.0
          %841 = vmatprep.subr.mxu0 0.0
          %842 = vmatpush1.msra.mxu0 0.0
          %843 = vmatprep.subr.mxu0 0.0
          %844 = vmatpush1.msra.mxu0 0.0
          %845 = vmatprep.subr.mxu0 0.0
          %846 = vmatpush1.msra.mxu0 0.0
          %847 = vmatprep.mubr.f32.mxu0 0.0
          %848 = vmatmul.mubr.f32.gmra.mrb[0].mxu0 %v743
          %v849 = vpop.f32.mrb[0].mxu0
          %v850 = vadd.f32 0.0, %v849
          %v851 = vpop.f32.mrb[0].mxu0
          %852 = vmatprep.mubr.f32.mxu0 0.0
          %853 = vmatmul.mubr.f32.gmra.mrb[0].mxu0 %v744
          %v854 = vpop.f32.mrb[0].mxu0
          %v855 = vadd.f32 0.0, %v854
          %v856 = vpop.f32.mrb[0].mxu0
          %857 = vmatprep.mubr.f32.mxu0 0.0
          %858 = vmatmul.mubr.f32.gmra.mrb[0].mxu0 %v745
          %v859 = vpop.f32.mrb[0].mxu0
          %v860 = vadd.f32 0.0, %v859
          %v861 = vpop.f32.mrb[0].mxu0
          %862 = vmatprep.mubr.f32.mxu0 0.0
          %863 = vmatmul.mubr.f32.gmra.mrb[0].mxu0 %v746
          %v864 = vpop.f32.mrb[0].mxu0
          %v865 = vadd.f32 0.0, %v864
          %v866 = vpop.f32.mrb[0].mxu0
          %867 = vmatprep.mubr.f32.mxu0 0.0
          %868 = vmatmul.mubr.f32.gmra.mrb[0].mxu0 %v747
          %v869 = vpop.f32.mrb[0].mxu0
          %v870 = vadd.f32 0.0, %v869
          %v871 = vpop.f32.mrb[0].mxu0
          %872 = vmatprep.mubr.f32.mxu0 0.0
          %873 = vmatmul.mubr.f32.gmra.mrb[0].mxu0 %v748
          %v874 = vpop.f32.mrb[0].mxu0
          %v875 = vadd.f32 0.0, %v874
          %v876 = vpop.f32.mrb[0].mxu0
          %877 = vmatprep.mubr.f32.mxu0 0.0
          %878 = vmatmul.mubr.f32.gmra.mrb[0].mxu0 %v749
          %v879 = vpop.f32.mrb[0].mxu0
          %v880 = vadd.f32 0.0, %v879
          %v881 = vpop.f32.mrb[0].mxu0
          %882 = vmatprep.mubr.f32.mxu0 0.0
          %883 = vmatmul.mubr.f32.gmra.mrb[0].mxu0 %v750
          %v884 = vpop.f32.mrb[0].mxu0
          %v885 = vadd.f32 0.0, %v884
          %v886 = vpop.f32.mrb[0].mxu0
          %887 = vdwg.mxu0
          %888 = vmatprep.subr.mxu0 0.0
          %889 = vmatpush1.msra.mxu0 %v751
          %890 = vmatprep.subr.mxu0 0.0
          %891 = vmatpush1.msra.mxu0 %v752
          %892 = vmatprep.subr.mxu0 0.0
          %893 = vmatpush1.msra.mxu0 %v753
          %894 = vmatprep.subr.mxu0 0.0
          %895 = vmatpush1.msra.mxu0 %v754
          %896 = vmatprep.subr.mxu0 0.0
          %897 = vmatpush1.msra.mxu0 %v755
          %898 = vmatprep.subr.mxu0 0.0
          %899 = vmatpush1.msra.mxu0 %v756
          %900 = vmatprep.subr.mxu0 0.0
          %901 = vmatpush1.msra.mxu0 %v757
          %902 = vmatprep.subr.mxu0 0.0
          %903 = vmatpush1.msra.mxu0 %v758
          %904 = vmatprep.subr.mxu0 0.0
          %905 = vmatpush1.msra.mxu0 %v759
          %906 = vmatprep.subr.mxu0 0.0
          %907 = vmatpush1.msra.mxu0 %v760
          %908 = vmatprep.subr.mxu0 0.0
          %909 = vmatpush1.msra.mxu0 %v761
          %910 = vmatprep.subr.mxu0 0.0
          %911 = vmatpush1.msra.mxu0 %v762
          %912 = vmatprep.subr.mxu0 0.0
          %913 = vmatpush1.msra.mxu0 %v763
          %914 = vmatprep.subr.mxu0 0.0
          %915 = vmatpush1.msra.mxu0 %v764
          %916 = vmatprep.subr.mxu0 0.0
          %917 = vmatpush1.msra.mxu0 %v765
          %918 = vmatprep.subr.mxu0 0.0
          %919 = vmatpush1.msra.mxu0 %v766
          %920 = vmatprep.subr.mxu0 0.0
          %921 = vmatpush1.msra.mxu0 0.0
          %922 = vmatprep.subr.mxu0 0.0
          %923 = vmatpush1.msra.mxu0 0.0
          %924 = vmatprep.subr.mxu0 0.0
          %925 = vmatpush1.msra.mxu0 0.0
          %926 = vmatprep.subr.mxu0 0.0
          %927 = vmatpush1.msra.mxu0 0.0
          %928 = vmatprep.subr.mxu0 0.0
          %929 = vmatpush1.msra.mxu0 0.0
          %930 = vmatprep.subr.mxu0 0.0
          %931 = vmatpush1.msra.mxu0 0.0
          %932 = vmatprep.subr.mxu0 0.0
          %933 = vmatpush1.msra.mxu0 0.0
          %934 = vmatprep.subr.mxu0 0.0
          %935 = vmatpush1.msra.mxu0 0.0
          %936 = vmatprep.subr.mxu0 0.0
          %937 = vmatpush1.msra.mxu0 0.0
          %938 = vmatprep.subr.mxu0 0.0
          %939 = vmatpush1.msra.mxu0 0.0
          %940 = vmatprep.subr.mxu0 0.0
          %941 = vmatpush1.msra.mxu0 0.0
          %942 = vmatprep.subr.mxu0 0.0
          %943 = vmatpush1.msra.mxu0 0.0
          %944 = vmatprep.subr.mxu0 0.0
          %945 = vmatpush1.msra.mxu0 0.0
          %946 = vmatprep.subr.mxu0 0.0
          %947 = vmatpush1.msra.mxu0 0.0
          %948 = vmatprep.subr.mxu0 0.0
          %949 = vmatpush1.msra.mxu0 0.0
          %950 = vmatprep.subr.mxu0 0.0
          %951 = vmatpush1.msra.mxu0 0.0
          %952 = vmatprep.mubr.f32.mxu0 0.0
          %953 = vmatmul.mubr.f32.gmra.mrb[0].mxu0 %v623
          %v954 = vpop.f32.mrb[0].mxu0
          %v955 = vadd.f32 %v850, %v954
          %v956 = vpop.f32.mrb[0].mxu0
          %957 = vmatprep.mubr.f32.mxu0 0.0
          %958 = vmatmul.mubr.f32.gmra.mrb[0].mxu0 %v624
          %v959 = vpop.f32.mrb[0].mxu0
          %v960 = vadd.f32 %v855, %v959
          %v961 = vpop.f32.mrb[0].mxu0
          %962 = vmatprep.mubr.f32.mxu0 0.0
          %963 = vmatmul.mubr.f32.gmra.mrb[0].mxu0 %v625
          %v964 = vpop.f32.mrb[0].mxu0
          %v965 = vadd.f32 %v860, %v964
          %v966 = vpop.f32.mrb[0].mxu0
          %967 = vmatprep.mubr.f32.mxu0 0.0
          %968 = vmatmul.mubr.f32.gmra.mrb[0].mxu0 %v626
          %v969 = vpop.f32.mrb[0].mxu0
          %v970 = vadd.f32 %v865, %v969
          %v971 = vpop.f32.mrb[0].mxu0
          %972 = vmatprep.mubr.f32.mxu0 0.0
          %973 = vmatmul.mubr.f32.gmra.mrb[0].mxu0 %v627
          %v974 = vpop.f32.mrb[0].mxu0
          %v975 = vadd.f32 %v870, %v974
          %v976 = vpop.f32.mrb[0].mxu0
          %977 = vmatprep.mubr.f32.mxu0 0.0
          %978 = vmatmul.mubr.f32.gmra.mrb[0].mxu0 %v628
          %v979 = vpop.f32.mrb[0].mxu0
          %v980 = vadd.f32 %v875, %v979
          %v981 = vpop.f32.mrb[0].mxu0
          %982 = vmatprep.mubr.f32.mxu0 0.0
          %983 = vmatmul.mubr.f32.gmra.mrb[0].mxu0 %v629
          %v984 = vpop.f32.mrb[0].mxu0
          %v985 = vadd.f32 %v880, %v984
          %v986 = vpop.f32.mrb[0].mxu0
          %987 = vmatprep.mubr.f32.mxu0 0.0
          %988 = vmatmul.mubr.f32.gmra.mrb[0].mxu0 %v630
          %v989 = vpop.f32.mrb[0].mxu0
          %v990 = vadd.f32 %v885, %v989
          %v991 = vpop.f32.mrb[0].mxu0
          %992 = vdwg.mxu0
          %v993 = vld [vmem:[%s5] sm:$0x1]
          %v995 = vlaneseq
          %v996 = vshrl.u32 %v995, 7
          %v997 = vsub.s32 0, %v996
          %v998 = vrot.slane %v993, %v997
          %v1000 = vadd.f32 %v955, %v998
          %v1001 = vadd.f32 %v960, %v998
          %v1002 = vadd.f32 %v965, %v998
          %v1003 = vadd.f32 %v970, %v998
          %v1004 = vadd.f32 %v975, %v998
          %v1005 = vadd.f32 %v980, %v998
          %v1006 = vadd.f32 %v985, %v998
          %v1007 = vadd.f32 %v990, %v998
          %1008 = vadd.xlane.f32.xlu0 %v1000
          %v1009 = vpop.xlane.xlu0 %1008
          %1010 = vadd.xlane.f32.xlu0 %v1001
          %v1011 = vpop.xlane.xlu0 %1010
          %1012 = vadd.xlane.f32.xlu0 %v1002
          %v1013 = vpop.xlane.xlu0 %1012
          %1014 = vadd.xlane.f32.xlu0 %v1003
          %v1015 = vpop.xlane.xlu0 %1014
          %1016 = vadd.xlane.f32.xlu0 %v1004
          %v1017 = vpop.xlane.xlu0 %1016
          %1018 = vadd.xlane.f32.xlu0 %v1005
          %v1019 = vpop.xlane.xlu0 %1018
          %1020 = vadd.xlane.f32.xlu0 %v1006
          %v1021 = vpop.xlane.xlu0 %1020
          %1022 = vadd.xlane.f32.xlu0 %v1007
          %v1023 = vpop.xlane.xlu0 %1022
          %v1024 = vmul.f32 %v1009, 0.03125
          %v1025 = vmul.f32 %v1011, 0.03125
          %v1026 = vmul.f32 %v1013, 0.03125
          %v1027 = vmul.f32 %v1015, 0.03125
          %v1028 = vmul.f32 %v1017, 0.03125
          %v1029 = vmul.f32 %v1019, 0.03125
          %v1030 = vmul.f32 %v1021, 0.03125
          %v1031 = vmul.f32 %v1023, 0.03125
          %v1032 = vlaneseq
          %v1033 = vand.u32 %v1032, 127
          %vm1034 = vcmp.lt.s32.totalorder %v1033, 32
          %v1035 = vsub.f32 %v1000, %v1024
          %v1036 = vsub.f32 %v1001, %v1025
          %v1037 = vsub.f32 %v1002, %v1026
          %v1038 = vsub.f32 %v1003, %v1027
          %v1039 = vsub.f32 %v1004, %v1028
          %v1040 = vsub.f32 %v1005, %v1029
          %v1041 = vsub.f32 %v1006, %v1030
          %v1042 = vsub.f32 %v1007, %v1031
          %v1043 = vsel %vm1034, %v1035, 0.0
          %v1044 = vsel %vm1034, %v1036, 0.0
          %v1045 = vsel %vm1034, %v1037, 0.0
          %v1046 = vsel %vm1034, %v1038, 0.0
          %v1047 = vsel %vm1034, %v1039, 0.0
          %v1048 = vsel %vm1034, %v1040, 0.0
          %v1049 = vsel %vm1034, %v1041, 0.0
          %v1050 = vsel %vm1034, %v1042, 0.0
          %v1051 = vmul.f32 %v1043, %v1043
          %v1052 = vmul.f32 %v1044, %v1044
          %v1053 = vmul.f32 %v1045, %v1045
          %v1054 = vmul.f32 %v1046, %v1046
          %v1055 = vmul.f32 %v1047, %v1047
          %v1056 = vmul.f32 %v1048, %v1048
          %v1057 = vmul.f32 %v1049, %v1049
          %v1058 = vmul.f32 %v1050, %v1050
          %1059 = vadd.xlane.f32.xlu0 %v1051
          %v1060 = vpop.xlane.xlu0 %1059
          %1061 = vadd.xlane.f32.xlu0 %v1052
          %v1062 = vpop.xlane.xlu0 %1061
          %1063 = vadd.xlane.f32.xlu0 %v1053
          %v1064 = vpop.xlane.xlu0 %1063
          %1065 = vadd.xlane.f32.xlu0 %v1054
          %v1066 = vpop.xlane.xlu0 %1065
          %1067 = vadd.xlane.f32.xlu0 %v1055
          %v1068 = vpop.xlane.xlu0 %1067
          %1069 = vadd.xlane.f32.xlu0 %v1056
          %v1070 = vpop.xlane.xlu0 %1069
          %1071 = vadd.xlane.f32.xlu0 %v1057
          %v1072 = vpop.xlane.xlu0 %1071
          %1073 = vadd.xlane.f32.xlu0 %v1058
          %v1074 = vpop.xlane.xlu0 %1073
          %v1075 = vmul.f32 %v1060, 0.03125
          %v1076 = vmul.f32 %v1062, 0.03125
          %v1077 = vmul.f32 %v1064, 0.03125
          %v1078 = vmul.f32 %v1066, 0.03125
          %v1079 = vmul.f32 %v1068, 0.03125
          %v1080 = vmul.f32 %v1070, 0.03125
          %v1081 = vmul.f32 %v1072, 0.03125
          %v1082 = vmul.f32 %v1074, 0.03125
          %v1083 = vadd.f32 %v1075, 1e-05
          %v1084 = vadd.f32 %v1076, 1e-05
          %v1085 = vadd.f32 %v1077, 1e-05
          %v1086 = vadd.f32 %v1078, 1e-05
          %v1087 = vadd.f32 %v1079, 1e-05
          %v1088 = vadd.f32 %v1080, 1e-05
          %v1089 = vadd.f32 %v1081, 1e-05
          %v1090 = vadd.f32 %v1082, 1e-05
          %v1091 = vrsqrt.pop %v1083
          %v1092 = vrsqrt.pop %v1084
          %v1093 = vrsqrt.pop %v1085
          %v1094 = vrsqrt.pop %v1086
          %v1095 = vrsqrt.pop %v1087
          %v1096 = vrsqrt.pop %v1088
          %v1097 = vrsqrt.pop %v1089
          %v1098 = vrsqrt.pop %v1090
          %v1099 = vmul.f32 %v1043, %v1091
          %v1100 = vmul.f32 %v1044, %v1092
          %v1101 = vmul.f32 %v1045, %v1093
          %v1102 = vmul.f32 %v1046, %v1094
          %v1103 = vmul.f32 %v1047, %v1095
          %v1104 = vmul.f32 %v1048, %v1096
          %v1105 = vmul.f32 %v1049, %v1097
          %v1106 = vmul.f32 %v1050, %v1098
          %v1107 = vld [vmem:[%s6] sm:$0x1]
          %v1109 = vlaneseq
          %v1110 = vshrl.u32 %v1109, 7
          %v1111 = vsub.s32 0, %v1110
          %v1112 = vrot.slane %v1107, %v1111
          %v1114 = vmul.f32 %v1099, %v1112
          %v1115 = vmul.f32 %v1100, %v1112
          %v1116 = vmul.f32 %v1101, %v1112
          %v1117 = vmul.f32 %v1102, %v1112
          %v1118 = vmul.f32 %v1103, %v1112
          %v1119 = vmul.f32 %v1104, %v1112
          %v1120 = vmul.f32 %v1105, %v1112
          %v1121 = vmul.f32 %v1106, %v1112
          %v1122 = vld [vmem:[%s7] sm:$0x1]
          %v1124 = vlaneseq
          %v1125 = vshrl.u32 %v1124, 7
          %v1126 = vsub.s32 0, %v1125
          %v1127 = vrot.slane %v1122, %v1126
          %v1129 = vadd.f32 %v1114, %v1127
          %v1130 = vadd.f32 %v1115, %v1127
          %v1131 = vadd.f32 %v1116, %v1127
          %v1132 = vadd.f32 %v1117, %v1127
          %v1133 = vadd.f32 %v1118, %v1127
          %v1134 = vadd.f32 %v1119, %v1127
          %v1135 = vadd.f32 %v1120, %v1127
          %v1136 = vadd.f32 %v1121, %v1127
          %v1137 = vmax.f32 %v1129, 0.0
          %v1138 = vmax.f32 %v1130, 0.0
          %v1139 = vmax.f32 %v1131, 0.0
          %v1140 = vmax.f32 %v1132, 0.0
          %v1141 = vmax.f32 %v1133, 0.0
          %v1142 = vmax.f32 %v1134, 0.0
          %v1143 = vmax.f32 %v1135, 0.0
          %v1144 = vmax.f32 %v1136, 0.0
          %1145 = vst [vmem:[%s436] sm:$0xff] %v1137
          %1146 = vst [vmem:[%s436 + $0x8] sm:$0xff] %v1138
          %1147 = vst [vmem:[%s436 + $0x10] sm:$0xff] %v1139
          %1148 = vst [vmem:[%s436 + $0x18] sm:$0xff] %v1140
          %1149 = vst [vmem:[%s436 + $0x20] sm:$0xff] %v1141
          %1150 = vst [vmem:[%s436 + $0x28] sm:$0xff] %v1142
          %1151 = vst [vmem:[%s436 + $0x30] sm:$0xff] %v1143
          %1152 = vst [vmem:[%s436 + $0x38] sm:$0xff] %v1144
        $region101: #{graphsage_forward.1} parent=88 // pred_fallthru
          _
        %s1153 = smul.u32 8, %s23
        %p1154 = scmp.lt.s32.totalorder %s1153, 31
        %s1155 = scalar_select %p1154, %s1153, 31
        %s1156 = smul.addr %s1155, 8
        %s1157 = scalar_lea.vmem %s8, %s1156
        // Predicated region
        $region102: #{graphsage_forward.1} parent=88 // pred_check
          %p1158 = pneg %p234
        $region103: #{graphsage_forward.1} parent=88 // pred_check_branch
          %1160 = sbr.rel (%p1158) target = $region105
        $region104: #{graphsage_forward.1} parent=88 // pred_region
          %s1161 = smul.u32 8, %s23
        $region105: #{graphsage_forward.1} parent=88 // pred_fallthru
          _
      $region89: #{graphsage_forward.1} parent=5 // pred_fallthru
        _
      %p1162 = scmp.le.s32.totalorder 2, %s14
      // Predicated region
      $region106: #{graphsage_forward.1} parent=5 // pred_check
        %p1163 = pneg %p1162
      $region107: #{graphsage_forward.1} parent=5 // pred_check_branch
        %1165 = sbr.rel (%p1163) target = $region109
      $region108: #{graphsage_forward.1} parent=5 // pred_region
        %s1166 = ssub.s32 %s14, 2
        // Predicated region
        $region110: #{graphsage_forward.1} parent=108 // pred_check
          %p1167 = pneg %p240
        $region111: #{graphsage_forward.1} parent=108 // pred_check_branch
          %1169 = sbr.rel (%p1167) target = $region113
        $region112: #{graphsage_forward.1} parent=108 // pred_region
          %s1170 = smul.u32 8, %s25
          %p1171 = scmp.lt.s32.totalorder %s1170, 31
          %s1172 = scalar_select %p1171, %s1170, 31
          %s1173 = smul.addr %s1172, 8
          %s1174 = scalar_lea.vmem %s8, %s1173
        $region113: #{graphsage_forward.1} parent=108 // pred_fallthru
          _
      $region109: #{graphsage_forward.1} parent=5 // pred_fallthru
        _
    $region6: #{graphsage_forward.1} parent=1 // loop_footer
      %s18 = sadd.s32 1, %s14
    $region7: #{graphsage_forward.1} parent=1 // loop_footer_branch
      %13 = sbr.rel target = $region3
    $region8: #{graphsage_forward.1} parent=1 // loop_exit
      _

</llo_original>
